<compile_context>
chip_gen: v5e
topology: v5e:2x2
jax: 0.10.0
libtpu: 0.0.40
codegen_flags: <defaults>
</compile_context>

<pallas_src>
import functools
import math

import jax
import jax.numpy as jnp
from jax.experimental import pallas as pl
from jax.experimental.pallas import tpu as pltpu

_LANES = 128


def _round_up(n, m):
    return ((n + m - 1) // m) * m


def _attention2d_kernel(x_ref, w1_ref, w2_ref, b2_ref, out_ref, acc_ref,
                        *, total_hw, need_mask):
    # x_ref:   [b_tile, C, hw_tile]  current HW slab of the activation
    # w1_ref:  [C, hidden]           fc1 weight, pre-transposed, pre-scaled by 1/(H*W)
    # w2_ref:  [hidden, K]           fc2 weight, pre-transposed, pre-scaled by 1/T
    # b2_ref:  [1, K]                fc2 bias, pre-scaled by 1/T
    # out_ref: [b_tile, K]           softmax attention weights (written on last HW step)
    # acc_ref: [b_tile, C, 128]      f32 running partial sums over HW (VMEM scratch)
    s = pl.program_id(1)
    n_s = pl.num_programs(1)

    @pl.when(s == 0)
    def _():
        acc_ref[...] = jnp.zeros_like(acc_ref)

    b_tile, c, hw_tile = x_ref.shape
    n_chunks = hw_tile // _LANES
    x = x_ref[...].astype(jnp.float32).reshape(b_tile, c, n_chunks, _LANES)

    if need_mask:
        # Zero out lanes past the true H*W on the (padded) remainder tile.
        start = s * hw_tile
        chunk = jax.lax.broadcasted_iota(jnp.int32, (1, 1, n_chunks, _LANES), 2)
        lane = jax.lax.broadcasted_iota(jnp.int32, (1, 1, n_chunks, _LANES), 3)
        pos = start + chunk * _LANES + lane
        x = jnp.where(pos < total_hw, x, 0.0)

    # Cheap per-tile VALU adds; the expensive cross-lane reduce happens once below.
    acc_ref[...] += jnp.sum(x, axis=2)

    @pl.when(s == n_s - 1)
    def _():
        # pooled sum over HW; the 1/(H*W) mean scale is folded into w1.
        pooled = jnp.sum(acc_ref[...], axis=-1)                               # [b_tile, C]
        h = jnp.dot(pooled, w1_ref[...], preferred_element_type=jnp.float32)  # [b_tile, hidden]
        h = jnp.maximum(h, 0.0)                                               # ReLU
        logits = jnp.dot(h, w2_ref[...],
                         preferred_element_type=jnp.float32) + b2_ref[...]    # [b_tile, K], already /T
        z = logits - jnp.max(logits, axis=-1, keepdims=True)                  # stable softmax
        e = jnp.exp(z)
        out_ref[...] = (e / jnp.sum(e, axis=-1, keepdims=True)).astype(out_ref.dtype)


def attention2d_forward(x, w1, w2, b2, temperature, *, hw_tile=None, b_tile=None):
    """x: [B, C, H, W] (NCHW, matching PyTorch). Returns [B, K] float32 softmax weights."""
    B, C, H, W = x.shape
    hidden = w1.shape[0]
    K = w2.shape[0]
    HW = H * W

    if b_tile is None:
        b_tile = B                      # if tiling B, use a multiple of 8 or the full B
    assert B % b_tile == 0

    if hw_tile is None:
        # Modest, lane-aligned tiles: enough to sit near the HBM roofline while staying
        # well inside the scoped-VMEM defaults on v5e/v6e/v7x with double-buffering.
        if HW % _LANES == 0 and HW <= 512:
            hw_tile = HW
        else:
            hw_tile = min(512, _round_up(HW, _LANES))
    assert hw_tile % _LANES == 0

    n_b = B // b_tile
    n_hw = pl.cdiv(HW, hw_tile)
    need_mask = (HW % hw_tile) != 0

    x3 = x.reshape(B, C, HW)

    # Fold constants and pre-transpose so the kernel does no transposes / extra scales:
    #   mean @ w1.T          == sum @ (w1.T / HW)
    #   (h @ w2.T + b2) / T  == h @ (w2.T / T) + b2 / T
    w1t = (w1.T.astype(jnp.float32) / jnp.float32(HW))                 # [C, hidden]
    w2t = (w2.T.astype(jnp.float32) / jnp.float32(temperature))        # [hidden, K]
    b2t = (b2.astype(jnp.float32) / jnp.float32(temperature)).reshape(1, K)

    kernel = functools.partial(_attention2d_kernel, total_hw=HW, need_mask=need_mask)

    itemsize = jnp.dtype(x3.dtype).itemsize
    cost = pl.CostEstimate(
        flops=int(B * C * HW + 2 * B * C * hidden + 2 * B * hidden * K),
        transcendentals=int(B * K),
        bytes_accessed=int(B * C * HW * itemsize
                           + (C * hidden + hidden * K + K + B * K) * 4),
    )

    return pl.pallas_call(
        kernel,
        out_shape=jax.ShapeDtypeStruct((B, K), jnp.float32),
        grid_spec=pltpu.PrefetchScalarGridSpec(
            num_scalar_prefetch=0,
            grid=(n_b, n_hw),
            in_specs=[
                # x slab: tiled over batch and HW (HW is the innermost reduction axis).
                pl.BlockSpec((b_tile, C, hw_tile), lambda b, s: (b, 0, s)),
                # Weights / bias: constant index maps -> stay resident in VMEM.
                pl.BlockSpec((C, hidden), lambda b, s: (0, 0)),
                pl.BlockSpec((hidden, K), lambda b, s: (0, 0)),
                pl.BlockSpec((1, K), lambda b, s: (0, 0)),
            ],
            # Same output block across the HW axis -> resident accumulator-style output.
            out_specs=pl.BlockSpec((b_tile, K), lambda b, s: (b, 0)),
            scratch_shapes=[pltpu.VMEM((b_tile, C, _LANES), jnp.float32)],
        ),
        compiler_params=pltpu.CompilerParams(
            dimension_semantics=("parallel", "arbitrary"),
        ),
        cost_estimate=cost,
    )(x3, w1t, w2t, b2t)


def init_params(key, in_planes, ratios, K):
    """Deterministic init matching Attention2d.__init__ / _initialize_weights.

    kaiming_normal_(mode='fan_out', nonlinearity='relu') on 1x1 convs:
      std = sqrt(2 / (out_channels * kH * kW)) = sqrt(2 / out_channels)
    bias of fc2 initialized to 0.
    """
    if in_planes != 3:
        hidden = int(in_planes * ratios) + 1
    else:
        hidden = K
    k1, k2 = jax.random.split(key)
    std1 = math.sqrt(2.0 / hidden)   # fan_out of fc1 = hidden * 1 * 1
    std2 = math.sqrt(2.0 / K)        # fan_out of fc2 = K * 1 * 1
    w1 = jax.random.normal(k1, (hidden, in_planes), dtype=jnp.float32) * std1
    w2 = jax.random.normal(k2, (K, hidden), dtype=jnp.float32) * std2
    b2 = jnp.zeros((K,), dtype=jnp.float32)
    return w1, w2, b2


def _reference(x, w1, w2, b2, temperature):
    # Pure-JAX reference of the PyTorch forward, for a sanity check.
    pooled = jnp.mean(x.astype(jnp.float32), axis=(2, 3))          # [B, C]
    h = jnp.maximum(pooled @ w1.T, 0.0)                            # [B, hidden]
    logits = h @ w2.T + b2[None, :]                                # [B, K]
    return jax.nn.softmax(logits / temperature, axis=1)


if __name__ == "__main__":
    # Small config consistent with the module: in_planes=4, ratios=0.25 -> hidden=2,
    # K=4 experts, temperature=30 (typical dynamic-conv setting).
    B, C, H, W = 2, 4, 16, 16
    ratios, K, temperature = 0.25, 4, 30.0

    key = jax.random.PRNGKey(0)
    kx, kp = jax.random.split(key)
    x = jax.random.normal(kx, (B, C, H, W), dtype=jnp.float32)
    w1, w2, b2 = init_params(kp, C, ratios, K)

    # hw_tile=128 -> 2 HW grid steps: exercises the accumulate-then-finalize pipeline.
    out = attention2d_forward(x, w1, w2, b2, temperature, hw_tile=128)
    out = jax.block_until_ready(out)

    ref = _reference(x, w1, w2, b2, temperature)
    assert out.shape == (B, K)
    assert jnp.allclose(out, ref, atol=1e-5, rtol=1e-5)
    assert jnp.allclose(jnp.sum(out, axis=1), 1.0, atol=1e-5)

    # Non-multiple spatial size (15x15 = 225) exercises the remainder-tile masking path.
    x2 = jax.random.normal(jax.random.PRNGKey(1), (B, C, 15, 15), dtype=jnp.float32)
    out2 = jax.block_until_ready(
        attention2d_forward(x2, w1, w2, b2, temperature, hw_tile=128))
    assert jnp.allclose(out2, _reference(x2, w1, w2, b2, temperature),
                        atol=1e-5, rtol=1e-5)

    print("KERNEL_OK")
</pallas_src>

<mosaic_0001>
module attributes {stable_mosaic.version = 11 : i64} {
  func.func @_attention2d_kernel(%arg0: i32, %arg1: i32, %arg2: memref<2x4x128xf32, #tpu.memory_space<vmem>>, %arg3: memref<4x2xf32, #tpu.memory_space<vmem>>, %arg4: memref<2x4xf32, #tpu.memory_space<vmem>>, %arg5: memref<1x4xf32, #tpu.memory_space<vmem>>, %arg6: memref<2x4xf32, #tpu.memory_space<vmem>>, %arg7: memref<2x4x128xf32, #tpu.memory_space<vmem>>) attributes {dimension_semantics = [#tpu.dimension_semantics<parallel>, #tpu.dimension_semantics<arbitrary>], iteration_bounds = array<i64: 1, 2>, scalar_prefetch = 0 : i64, scratch_operands = 1 : i64, tpu.core_type = #tpu.core_type<tc>, window_params = [{transform_indices = @transform_0, window_bounds = array<i64: 2, 4, 128>}, {pipeline_mode = #tpu.pipeline_mode<synchronous>, transform_indices = @transform_1, window_bounds = array<i64: 4, 2>}, {pipeline_mode = #tpu.pipeline_mode<synchronous>, transform_indices = @transform_2, window_bounds = array<i64: 2, 4>}, {pipeline_mode = #tpu.pipeline_mode<synchronous>, transform_indices = @transform_3, window_bounds = array<i64: 1, 4>}, {transform_indices = @transform_4, window_bounds = array<i64: 2, 4>}]} {
    %c0_i32 = arith.constant 0 : i32
    %0 = arith.cmpi eq, %arg1, %c0_i32 : i32
    %1 = arith.extui %0 : i1 to i32
    %c0_i32_0 = arith.constant 0 : i32
    %2 = arith.cmpi ne, %1, %c0_i32_0 : i32
    scf.if %2 {
      %cst_10 = arith.constant 0.000000e+00 : f32
      %12 = vector.broadcast %cst_10 : f32 to vector<2x4x128xf32>
      %c0_11 = arith.constant 0 : index
      %c0_12 = arith.constant 0 : index
      %c0_13 = arith.constant 0 : index
      %13 = vector.load %arg7[%c0_11, %c0_12, %c0_13] : memref<2x4x128xf32, #tpu.memory_space<vmem>>, vector<2x4x128xf32>
      tpu.vector_store %arg7[%c0_11, %c0_12, %c0_13], %12 {strides = array<i32>} : memref<2x4x128xf32, #tpu.memory_space<vmem>>, vector<2x4x128xf32>,
    } else {
    }
    %c0 = arith.constant 0 : index
    %c0_1 = arith.constant 0 : index
    %c0_2 = arith.constant 0 : index
    %3 = vector.load %arg2[%c0, %c0_1, %c0_2] : memref<2x4x128xf32, #tpu.memory_space<vmem>>, vector<2x4x128xf32>
    %4 = vector.shape_cast %3 : vector<2x4x128xf32> to vector<2x4x1x128xf32>
    %c0_3 = arith.constant 0 : index
    %c0_4 = arith.constant 0 : index
    %c0_5 = arith.constant 0 : index
    %5 = vector.load %arg7[%c0_3, %c0_4, %c0_5] : memref<2x4x128xf32, #tpu.memory_space<vmem>>, vector<2x4x128xf32>
    %cst = arith.constant dense<0.000000e+00> : vector<2x4x128xf32>
    %6 = vector.multi_reduction <add>, %4, %cst [2] : vector<2x4x1x128xf32> to vector<2x4x128xf32>
    %7 = arith.addf %5, %6 : vector<2x4x128xf32>
    %c0_6 = arith.constant 0 : index
    %c0_7 = arith.constant 0 : index
    %c0_8 = arith.constant 0 : index
    %8 = vector.load %arg7[%c0_6, %c0_7, %c0_8] : memref<2x4x128xf32, #tpu.memory_space<vmem>>, vector<2x4x128xf32>
    tpu.vector_store %arg7[%c0_6, %c0_7, %c0_8], %7 {strides = array<i32>} : memref<2x4x128xf32, #tpu.memory_space<vmem>>, vector<2x4x128xf32>,
    %c1_i32 = arith.constant 1 : i32
    %9 = arith.cmpi eq, %arg1, %c1_i32 : i32
    %10 = arith.extui %9 : i1 to i32
    %c0_i32_9 = arith.constant 0 : i32
    %11 = arith.cmpi ne, %10, %c0_i32_9 : i32
    scf.if %11 {
      %c0_10 = arith.constant 0 : index
      %c0_11 = arith.constant 0 : index
      %c0_12 = arith.constant 0 : index
      %12 = vector.load %arg7[%c0_10, %c0_11, %c0_12] : memref<2x4x128xf32, #tpu.memory_space<vmem>>, vector<2x4x128xf32>
      %cst_13 = arith.constant dense<0.000000e+00> : vector<2x4xf32>
      %13 = vector.multi_reduction <add>, %12, %cst_13 [2] : vector<2x4x128xf32> to vector<2x4xf32>
      %c0_14 = arith.constant 0 : index
      %c0_15 = arith.constant 0 : index
      %14 = vector.load %arg3[%c0_14, %c0_15] : memref<4x2xf32, #tpu.memory_space<vmem>>, vector<4x2xf32>
      %cst_16 = arith.constant dense<0.000000e+00> : vector<2x2xf32>
      %15 = tpu.matmul %13, %14, %cst_16 {dimension_numbers = #tpu.dot_dimension_numbers<[1], [0], [0], [1], [0, 0, 1, 1], [], []>} : vector<2x4xf32>, vector<4x2xf32>, vector<2x2xf32> -> vector<2x2xf32>
      %cst_17 = arith.constant 0.000000e+00 : f32
      %16 = vector.broadcast %cst_17 : f32 to vector<2x2xf32>
      %17 = arith.maximumf %15, %16 : vector<2x2xf32>
      %c0_18 = arith.constant 0 : index
      %c0_19 = arith.constant 0 : index
      %18 = vector.load %arg4[%c0_18, %c0_19] : memref<2x4xf32, #tpu.memory_space<vmem>>, vector<2x4xf32>
      %cst_20 = arith.constant dense<0.000000e+00> : vector<2x4xf32>
      %19 = tpu.matmul %17, %18, %cst_20 {dimension_numbers = #tpu.dot_dimension_numbers<[1], [0], [0], [1], [0, 0, 1, 1], [], []>} : vector<2x2xf32>, vector<2x4xf32>, vector<2x4xf32> -> vector<2x4xf32>
      %c0_21 = arith.constant 0 : index
      %c0_22 = arith.constant 0 : index
      %20 = vector.load %arg5[%c0_21, %c0_22] : memref<1x4xf32, #tpu.memory_space<vmem>>, vector<1x4xf32>
      %21 = vector.broadcast %20 : vector<1x4xf32> to vector<2x4xf32>
      %22 = arith.addf %19, %21 : vector<2x4xf32>
      %cst_23 = arith.constant dense<0xFF800000> : vector<2xf32>
      %23 = vector.multi_reduction <maximumf>, %22, %cst_23 [1] : vector<2x4xf32> to vector<2xf32>
      %24 = vector.shape_cast %23 : vector<2xf32> to vector<2x1xf32>
      %25 = vector.broadcast %24 : vector<2x1xf32> to vector<2x4xf32>
      %26 = arith.subf %22, %25 : vector<2x4xf32>
      %27 = math.exp %26 : vector<2x4xf32>
      %cst_24 = arith.constant dense<0.000000e+00> : vector<2xf32>
      %28 = vector.multi_reduction <add>, %27, %cst_24 [1] : vector<2x4xf32> to vector<2xf32>
      %29 = vector.shape_cast %28 : vector<2xf32> to vector<2x1xf32>
      %30 = vector.broadcast %29 : vector<2x1xf32> to vector<2x4xf32>
      %31 = arith.divf %27, %30 : vector<2x4xf32>
      %c0_25 = arith.constant 0 : index
      %c0_26 = arith.constant 0 : index
      %32 = vector.load %arg6[%c0_25, %c0_26] : memref<2x4xf32, #tpu.memory_space<vmem>>, vector<2x4xf32>
      tpu.vector_store %arg6[%c0_25, %c0_26], %31 {strides = array<i32>} : memref<2x4xf32, #tpu.memory_space<vmem>>, vector<2x4xf32>,
    } else {
    }
    return
  }
  func.func @transform_0(%arg0: i32, %arg1: i32) -> (i32, i32, i32) {
    %c0_i32 = arith.constant 0 : i32
    %c0_i32_0 = arith.constant 0 : i32
    return %arg0, %c0_i32, %arg1 : i32, i32, i32
  }
  func.func @transform_1(%arg0: i32, %arg1: i32) -> (i32, i32) {
    %c0_i32 = arith.constant 0 : i32
    %c0_i32_0 = arith.constant 0 : i32
    %c0_i32_1 = arith.constant 0 : i32
    return %c0_i32, %c0_i32_0 : i32, i32
  }
  func.func @transform_2(%arg0: i32, %arg1: i32) -> (i32, i32) {
    %c0_i32 = arith.constant 0 : i32
    %c0_i32_0 = arith.constant 0 : i32
    %c0_i32_1 = arith.constant 0 : i32
    return %c0_i32, %c0_i32_0 : i32, i32
  }
  func.func @transform_3(%arg0: i32, %arg1: i32) -> (i32, i32) {
    %c0_i32 = arith.constant 0 : i32
    %c0_i32_0 = arith.constant 0 : i32
    %c0_i32_1 = arith.constant 0 : i32
    return %c0_i32, %c0_i32_0 : i32, i32
  }
  func.func @transform_4(%arg0: i32, %arg1: i32) -> (i32, i32) {
    %c0_i32 = arith.constant 0 : i32
    %c0_i32_0 = arith.constant 0 : i32
    return %arg0, %c0_i32 : i32, i32
  }
}

</mosaic_0001>

<llo_original>
// kernel: tpu_custom_call.1
$region0: #{tpu_custom_call.1}
  #allocation0 [shape = 'u32[]', space=smem, size = 0x4, offset = 0x4, fixed_abs, tag = 'smem constant byte address 0x4 - core index']
  #allocation1 [shape = 'u32[72,128]{1,0:T(1,128)}', space=vmem, size = 0x9000, scoped, tag = 'internal scratch']
  #allocation2 [shape = 'f32[2,4,128]{2,1,0:T(4,128)}', space=vmem, size = 0x1000, scoped, tag = 'scratch operand']
  %s0 = inlined_call_operand.hbm [shape: f32[2,4,256], index: 0, kind: input, shape index: {}]
  %s1 = inlined_call_operand.vmem [shape: f32[4,2], index: 1, kind: input, shape index: {}]
  %s2 = inlined_call_operand.vmem [shape: f32[2,4], index: 2, kind: input, shape index: {}]
  %s3 = inlined_call_operand.vmem [shape: f32[1,4], index: 3, kind: input, shape index: {}]
  %s4 = inlined_call_operand.hbm [shape: f32[2,4], index: 4, kind: output, shape index: {}]
  %s5 = sld [smem:[#allocation0]]
  $region61: #{tpu_custom_call.1} parent=0
    _
  %s7 = ssub.s32 1, %s5
  %s8 = scalar_select 0, %s7, %s5
  $region1: #{tpu_custom_call.1} parent=0
    #allocation3 [shape = 'u8[8192]{0}', space=vmem, size = 0x2000, scoped, tag = 'input window, operand 0']
    #allocation4 [shape = 's32[2]{0}', space=sflag, size = 0x8, scoped, tag = 'scoped memory for tpu_custom_call.1']
    #allocation5 [shape = 's32[2]{0}', space=sflag, size = 0x8, scoped, tag = 'scoped memory for tpu_custom_call.1']
    #allocation6 [shape = 'u8[1024]{0}', space=vmem, size = 0x400, scoped, tag = 'output window, operand 0, single buffered']
    %9 = vsyncpa [#allocation4], 0
    %s10 = scalar_lea.sflag [#allocation4], 1
    %11 = vsyncpa %s10, 0
    %12 = vsyncpa [#allocation5], 0
    loop: start=0, step=1, limit=4
    $region2: #{tpu_custom_call.1} parent=1 // loop_pre_header
      _
    $region3: #{tpu_custom_call.1} parent=1 // loop_header
      %s14 = sphi 0, %s18
      %p15 = scmp.ge.s32.totalorder %s14, 4
      %s21 = sphi 0, %s33
      %s22 = sphi 0, %s29
      %s23 = sphi 0, %s21
      %s24 = sphi 0, %s22
      %s25 = sphi 0, %s23
      %s26 = sphi 0, %s24
      %s38 = sphi 0, %s40
      %s41 = sphi 0, %s38
      %s42 = sphi 0, %s41
      %s58 = sphi 0, %s42
      %s62 = sphi 0, %s62
      %s64 = sphi 0, %s62
      %s65 = sphi 0, %s64
      %s79 = sphi 0, %s65
      %s83 = sphi 0, %s83
      %s85 = sphi 0, %s83
      %s86 = sphi 0, %s85
      %s100 = sphi 0, %s86
      %s104 = sphi 0, %s104
      %s106 = sphi 0, %s104
      %s107 = sphi 0, %s106
      %s121 = sphi 0, %s107
      %s127 = sphi 0, %s129
      %s130 = sphi 0, %s127
      %s131 = sphi 0, %s130
      %s147 = sphi 0, %s131
    $region4: #{tpu_custom_call.1} parent=1 // loop_header_branch
      %17 = sbr.rel (%p15) target = $region8
    $region5: #{tpu_custom_call.1} parent=1 // loop_body
      %s19 = ssub.s32 %s14, 1
      %s20 = ssub.s32 %s14, 2
      %s27 = sadd.s32 1, %s22
      %p28 = scmp.ge.s32.totalorder %s27, 2
      %s29 = scalar_select %p28, 0, %s27
      %s30 = sadd.s32 1, %s21
      %s31 = scalar_select %p28, %s30, %s21
      %p32 = scmp.ge.s32.totalorder %s31, 1
      %s33 = scalar_select %p32, 0, %s31
      %s34 = ssub.s32 %s21, %s33
      %s35 = ssub.s32 %s22, %s29
      %s36 = sor.u32 %s34, %s35
      %p37 = scmp.eq.s32.totalorder %s36, 0
      %s39 = sadd.s32 %s38, 1
      %s40 = scalar_select %p37, %s38, %s39
      %p43 = pneg %p37
      %p44 = scmp.eq.s32.totalorder %s14, 1
      %p45 = por %p43, %p44
      %p46 = scmp.ne.s32.totalorder %s38, %s41
      %p47 = scmp.eq.s32.totalorder %s14, 0
      %p48 = por %p46, %p47
      %p49 = scmp.ne.s32.totalorder %s38, %s41
      %p50 = scmp.eq.s32.totalorder %s19, 1
      %p51 = por %p49, %p50
      %p52 = scmp.ne.s32.totalorder %s41, %s42
      %p53 = scmp.eq.s32.totalorder %s19, 0
      %p54 = por %p52, %p53
      %p55 = scmp.ne.s32.totalorder %s41, %s42
      %p56 = scmp.eq.s32.totalorder %s20, 1
      %p57 = por %p55, %p56
      %p59 = scmp.ne.s32.totalorder %s42, %s58
      %p60 = scmp.eq.s32.totalorder %s20, 0
      %p61 = por %p59, %p60
      %s63 = sadd.s32 %s62, 1
      %p66 = scmp.eq.s32.totalorder %s14, 1
      %p67 = scmp.ne.s32.totalorder %s62, %s64
      %p68 = scmp.eq.s32.totalorder %s14, 0
      %p69 = por %p67, %p68
      %p70 = scmp.ne.s32.totalorder %s62, %s64
      %p71 = scmp.eq.s32.totalorder %s19, 1
      %p72 = por %p70, %p71
      %p73 = scmp.ne.s32.totalorder %s64, %s65
      %p74 = scmp.eq.s32.totalorder %s19, 0
      %p75 = por %p73, %p74
      %p76 = scmp.ne.s32.totalorder %s64, %s65
      %p77 = scmp.eq.s32.totalorder %s20, 1
      %p78 = por %p76, %p77
      %p80 = scmp.ne.s32.totalorder %s65, %s79
      %p81 = scmp.eq.s32.totalorder %s20, 0
      %p82 = por %p80, %p81
      %s84 = sadd.s32 %s83, 1
      %p87 = scmp.eq.s32.totalorder %s14, 1
      %p88 = scmp.ne.s32.totalorder %s83, %s85
      %p89 = scmp.eq.s32.totalorder %s14, 0
      %p90 = por %p88, %p89
      %p91 = scmp.ne.s32.totalorder %s83, %s85
      %p92 = scmp.eq.s32.totalorder %s19, 1
      %p93 = por %p91, %p92
      %p94 = scmp.ne.s32.totalorder %s85, %s86
      %p95 = scmp.eq.s32.totalorder %s19, 0
      %p96 = por %p94, %p95
      %p97 = scmp.ne.s32.totalorder %s85, %s86
      %p98 = scmp.eq.s32.totalorder %s20, 1
      %p99 = por %p97, %p98
      %p101 = scmp.ne.s32.totalorder %s86, %s100
      %p102 = scmp.eq.s32.totalorder %s20, 0
      %p103 = por %p101, %p102
      %s105 = sadd.s32 %s104, 1
      %p108 = scmp.eq.s32.totalorder %s14, 1
      %p109 = scmp.ne.s32.totalorder %s104, %s106
      %p110 = scmp.eq.s32.totalorder %s14, 0
      %p111 = por %p109, %p110
      %p112 = scmp.ne.s32.totalorder %s104, %s106
      %p113 = scmp.eq.s32.totalorder %s19, 1
      %p114 = por %p112, %p113
      %p115 = scmp.ne.s32.totalorder %s106, %s107
      %p116 = scmp.eq.s32.totalorder %s19, 0
      %p117 = por %p115, %p116
      %p118 = scmp.ne.s32.totalorder %s106, %s107
      %p119 = scmp.eq.s32.totalorder %s20, 1
      %p120 = por %p118, %p119
      %p122 = scmp.ne.s32.totalorder %s107, %s121
      %p123 = scmp.eq.s32.totalorder %s20, 0
      %p124 = por %p122, %p123
      %s125 = ssub.s32 %s21, %s33
      %p126 = scmp.eq.s32.totalorder %s125, 0
      %s128 = sadd.s32 %s127, 1
      %s129 = scalar_select %p126, %s127, %s128
      %p132 = pneg %p126
      %p133 = scmp.eq.s32.totalorder %s14, 1
      %p134 = por %p132, %p133
      %p135 = scmp.ne.s32.totalorder %s127, %s130
      %p136 = scmp.eq.s32.totalorder %s14, 0
      %p137 = por %p135, %p136
      %p138 = scmp.ne.s32.totalorder %s127, %s130
      %p139 = scmp.eq.s32.totalorder %s19, 1
      %p140 = por %p138, %p139
      %p141 = scmp.ne.s32.totalorder %s130, %s131
      %p142 = scmp.eq.s32.totalorder %s19, 0
      %p143 = por %p141, %p142
      %p144 = scmp.ne.s32.totalorder %s130, %s131
      %p145 = scmp.eq.s32.totalorder %s20, 1
      %p146 = por %p144, %p145
      %p148 = scmp.ne.s32.totalorder %s131, %s147
      %p149 = scmp.eq.s32.totalorder %s20, 0
      %p150 = por %p148, %p149
      %p151 = scmp.le.s32.totalorder 1, %s14
      %p152 = scmp.lt.s32.totalorder %s14, 3
      %p153 = pnand %p151, %p152
      %p154 = pneg %p153
      // Predicated region
      $region9: #{tpu_custom_call.1} parent=5 // pred_check
        _
      $region10: #{tpu_custom_call.1} parent=5 // pred_check_branch
        %156 = sbr.rel (%p153) target = $region12
      $region11: #{tpu_custom_call.1} parent=5 // pred_region
        %s157 = ssub.s32 %s14, 1
        // Predicated region
        $region13: #{tpu_custom_call.1} parent=11 // pred_check
          %p158 = pneg %p75
        $region14: #{tpu_custom_call.1} parent=11 // pred_check_branch
          %160 = sbr.rel (%p158) target = $region16
        $region15: #{tpu_custom_call.1} parent=11 // pred_region
          _
        $region16: #{tpu_custom_call.1} parent=11 // pred_fallthru
          _
        // Predicated region
        $region17: #{tpu_custom_call.1} parent=11 // pred_check
          %p161 = pneg %p96
        $region18: #{tpu_custom_call.1} parent=11 // pred_check_branch
          %163 = sbr.rel (%p161) target = $region20
        $region19: #{tpu_custom_call.1} parent=11 // pred_region
          _
        $region20: #{tpu_custom_call.1} parent=11 // pred_fallthru
          _
        // Predicated region
        $region21: #{tpu_custom_call.1} parent=11 // pred_check
          %p164 = pneg %p117
        $region22: #{tpu_custom_call.1} parent=11 // pred_check_branch
          %166 = sbr.rel (%p164) target = $region24
        $region23: #{tpu_custom_call.1} parent=11 // pred_region
          _
        $region24: #{tpu_custom_call.1} parent=11 // pred_fallthru
          _
      $region12: #{tpu_custom_call.1} parent=5 // pred_fallthru
        _
      %p167 = scmp.lt.s32.totalorder %s14, 2
      // Predicated region
      $region25: #{tpu_custom_call.1} parent=5 // pred_check
        %p168 = pneg %p167
      $region26: #{tpu_custom_call.1} parent=5 // pred_check_branch
        %170 = sbr.rel (%p168) target = $region28
      $region27: #{tpu_custom_call.1} parent=5 // pred_region
        // Predicated region
        $region29: #{tpu_custom_call.1} parent=27 // pred_check
          %p171 = pneg %p48
        $region30: #{tpu_custom_call.1} parent=27 // pred_check_branch
          %173 = sbr.rel (%p171) target = $region32
        $region31: #{tpu_custom_call.1} parent=27 // pred_region
          %s174 = sand.u32 %s38, 1
          %s175 = scalar_lea.sflag [#allocation4], %s174
          %s176 = sand.u32 %s38, 1
          %s177 = smul.addr %s176, 8
          %s178 = scalar_lea.vmem [#allocation3], %s177
          %s179 = smul.u32 2, %s21
          %181 = vsyncadd %s175, 0
          %s182 = smul.addr %s179, 2
          %s183 = sadd.s32 %s22, %s182
          %s184 = smul.addr %s183, 4
          %s185 = scalar_lea.hbm %s0, %s184
          %s186 = sshll.u32 %s185, 4
          %s187 = int_to_ptr.hbm [resolvable:$true] %s186
          %s188 = sshll.u32 %s178, 4
          %s189 = int_to_ptr.vmem [resolvable:$true] %s188
          %194 = dma.hbm_to_vmem [thread:$0]  %s187, 128, %s189, %s175, 128, 64, 4
        $region32: #{tpu_custom_call.1} parent=27 // pred_fallthru
          _
      $region28: #{tpu_custom_call.1} parent=5 // pred_fallthru
        _
      %p195 = scmp.le.s32.totalorder 1, %s14
      %p196 = scmp.lt.s32.totalorder %s14, 3
      %p197 = pnand %p195, %p196
      %p198 = pneg %p197
      // Predicated region
      $region33: #{tpu_custom_call.1} parent=5 // pred_check
        _
      $region34: #{tpu_custom_call.1} parent=5 // pred_check_branch
        %200 = sbr.rel (%p197) target = $region36
      $region35: #{tpu_custom_call.1} parent=5 // pred_region
        %s201 = ssub.s32 %s14, 1
        %s202 = sand.u32 %s41, 1
        %s203 = scalar_lea.sflag [#allocation4], %s202
        %s204 = sand.u32 %s41, 1
        %s205 = smul.addr %s204, 8
        %s206 = scalar_lea.vmem [#allocation3], %s205
        // Predicated region
        $region37: #{tpu_custom_call.1} parent=35 // pred_check
          %p207 = pneg %p54
        $region38: #{tpu_custom_call.1} parent=35 // pred_check_branch
          %209 = sbr.rel (%p207) target = $region40
        $region39: #{tpu_custom_call.1} parent=35 // pred_region
          %211 = dma.done %s203, 128
        $region40: #{tpu_custom_call.1} parent=35 // pred_fallthru
          _
        %s212 = sand.u32 %s41, 1
        %s213 = scalar_lea.sflag [#allocation4], %s212
        %s214 = sand.u32 %s41, 1
        %s215 = smul.addr %s214, 8
        %s216 = scalar_lea.vmem [#allocation3], %s215
        %p217 = pneg %p54
        %p218 = pneg %p51
        %p219 = pneg %p75
        %p220 = pneg %p72
        %p221 = pneg %p96
        %p222 = pneg %p93
        %p223 = pneg %p117
        %p224 = pneg %p114
        %p225 = pneg %p143
        %p226 = pneg %p140
        %s227 = smul.u32 2, %s23
        %p228 = scmp.eq.s32.totalorder %s24, 0
        // Predicated region
        $region41: #{tpu_custom_call.1} parent=35 // pred_check
          %p229 = pneg %p228
        $region42: #{tpu_custom_call.1} parent=35 // pred_check_branch
          %231 = sbr.rel (%p229) target = $region44
        $region43: #{tpu_custom_call.1} parent=35 // pred_region
          %232 = vst [vmem:[#allocation2] sm:$0xf] 0.0
          %233 = vst [vmem:[#allocation2 + $0x4] sm:$0xf] 0.0
        $region44: #{tpu_custom_call.1} parent=35 // pred_fallthru
          _
        %v234 = vld [vmem:[%s206] sm:$0xf]
        %v235 = vld [vmem:[%s206 + $0x4] sm:$0xf]
        %v236 = vld [vmem:[#allocation2] sm:$0xf]
        %v237 = vld [vmem:[#allocation2 + $0x4] sm:$0xf]
        %v238 = vadd.f32 %v234, 0.0
        %v239 = vadd.f32 %v235, 0.0
        %v240 = vadd.f32 %v236, %v238
        %v241 = vadd.f32 %v237, %v239
        %242 = vst [vmem:[#allocation2] sm:$0xf] %v240
        %243 = vst [vmem:[#allocation2 + $0x4] sm:$0xf] %v241
        %p244 = scmp.eq.s32.totalorder %s24, 1
        // Predicated region
        $region45: #{tpu_custom_call.1} parent=35 // pred_check
          %p245 = pneg %p244
        $region46: #{tpu_custom_call.1} parent=35 // pred_check_branch
          %247 = sbr.rel (%p245) target = $region48
        $region47: #{tpu_custom_call.1} parent=35 // pred_region
          %v248 = vld [vmem:[#allocation2] sm:$0xf]
          %v249 = vld [vmem:[#allocation2 + $0x4] sm:$0xf]
          %vm250 = vcmask 1043456
          %v251 = vsel %vm250, %v248, 0.0
          %252 = vadd.xlane.f32.xlu0 %v251
          %v253 = vpop.xlane.xlu0 %252
          %v254 = vsel %vm250, %v249, 0.0
          %255 = vadd.xlane.f32.xlu0 %v254
          %v256 = vpop.xlane.xlu0 %255
          %v257 = vld [vmem:[%s1] sm:$0xf]
          %v260 = vlaneseq
          %v261 = vand.u32 %v260, 127
          %v262 = vperm.slane %v253, %v261
          %v263 = vperm.slane %v256, %v261
          %vm264 = vcmask 1041409
          %v265 = vsel %vm264, %v263, %v262
          %vm266 = vcmask 31744
          %v267 = vsel %vm266, %v265, 0
          %v270 = vsel %vm250, %v257, 0
          %272 = vmatpush.msra.mxu0 0.0
          %273 = vmatpush.msra.mxu0 0.0
          %274 = vmatpush.msra.mxu0 0.0
          %275 = vmatpush.msra.mxu0 0.0
          %276 = vmatpush.msra.mxu0 0.0
          %277 = vmatpush.msra.mxu0 0.0
          %278 = vmatpush.msra.mxu0 0.0
          %279 = vmatpush.msra.mxu0 0.0
          %280 = vmatpush.msra.mxu0 0.0
          %281 = vmatpush.msra.mxu0 0.0
          %282 = vmatpush.msra.mxu0 0.0
          %283 = vmatpush.msra.mxu0 0.0
          %284 = vmatpush.msra.mxu0 0.0
          %285 = vmatpush.msra.mxu0 0.0
          %286 = vmatpush.msra.mxu0 0.0
          %287 = vmatpush.msra.mxu0 %v270
          %288 = vmatmul.f32.gmra.mxu0 %v267
          %v289 = vpop.f32.mrf.mxu0
          %v290 = vadd.f32 0.0, %v289
          %291 = vdwg.mxu0
          %v292 = vmax.f32 %v290, 0.0
          %v293 = vld [vmem:[%s2] sm:$0x3]
          %v294 = vld [vmem:[%s3] sm:$0x1]
          %v296 = vperm.slane %v294, 0
          %vm298 = vcmask 15360
          %v300 = vsel %vm298, %v292, 0
          %vm302 = vcmask 1041408
          %v304 = vsel %vm302, %v293, 0
          %306 = vmatpush.msra.mxu0 0.0
          %307 = vmatpush.msra.mxu0 0.0
          %308 = vmatpush.msra.mxu0 0.0
          %309 = vmatpush.msra.mxu0 0.0
          %310 = vmatpush.msra.mxu0 0.0
          %311 = vmatpush.msra.mxu0 0.0
          %312 = vmatpush.msra.mxu0 0.0
          %313 = vmatpush.msra.mxu0 0.0
          %314 = vmatpush.msra.mxu0 0.0
          %315 = vmatpush.msra.mxu0 0.0
          %316 = vmatpush.msra.mxu0 0.0
          %317 = vmatpush.msra.mxu0 0.0
          %318 = vmatpush.msra.mxu0 0.0
          %319 = vmatpush.msra.mxu0 0.0
          %320 = vmatpush.msra.mxu0 0.0
          %321 = vmatpush.msra.mxu0 %v304
          %322 = vmatmul.f32.gmra.mxu0 %v300
          %v323 = vpop.f32.mrf.mxu0
          %v324 = vadd.f32 %v296, %v323
          %325 = vdwg.mxu0
          %vm326 = vcmask 25600
          %v327 = vsel %vm326, %v324, -inf
          %328 = vmax.xlane.f32.xlu0 %v327
          %v329 = vpop.xlane.xlu0 %328
          %v330 = vsub.f32 %v324, %v329
          %v331 = vmul.f32 %v330, 1.442695
          %v332 = vpow.pop %v331
          %v333 = vsel %vm326, %v332, 0.0
          %334 = vadd.xlane.f32.xlu0 %v333
          %v335 = vpop.xlane.xlu0 %334
          %v336 = vrcp.pop %v335
          %v337 = vmul.f32 %v335, %v336
          %v338 = vsub.f32 1.0, %v337
          %v339 = vmul.f32 %v336, %v338
          %v340 = vadd.f32 %v336, %v339
          %vm341 = vweird.f32 %v335
          %vm342 = vweird.f32 %v336
          %vm343 = vmor %vm341, %vm342
          %v344 = vsel %vm343, %v336, %v340
          %v345 = vand.u32 2147483647, %v335
          %vm346 = vcmp.eq.f32.partialorder %v345, 8.507059e+37
          %v347 = vand.u32 %v335, 2147483648
          %v348 = vor.u32 1.1754944e-38, %v347
          %v349 = vsel %vm346, %v348, %v344
          %v350 = vmul.f32 %v332, %v349
          %351 = vst.msk [vmem:[#allocation6] sm:$0x3] %vm326, %v350
        $region48: #{tpu_custom_call.1} parent=35 // pred_fallthru
          _
        // Predicated region
        $region49: #{tpu_custom_call.1} parent=35 // pred_check
          %p352 = pneg %p140
        $region50: #{tpu_custom_call.1} parent=35 // pred_check_branch
          %354 = sbr.rel (%p352) target = $region52
        $region51: #{tpu_custom_call.1} parent=35 // pred_region
          %356 = vsyncadd [#allocation5], 0
          %s357 = smul.addr %s23, 2
          %s358 = scalar_lea.hbm %s4, %s357
          %s360 = sshll.u32 [#allocation6], 4
          %s361 = int_to_ptr.vmem [resolvable:$true] %s360
          %s362 = sshll.u32 %s358, 4
          %s363 = int_to_ptr.hbm [resolvable:$true] %s362
          %365 = dma.vmem_to_hbm [thread:$0]  %s361, 32, %s363, [#allocation5]
        $region52: #{tpu_custom_call.1} parent=35 // pred_fallthru
          _
        // Predicated region
        $region53: #{tpu_custom_call.1} parent=35 // pred_check
          %p366 = pneg %p140
        $region54: #{tpu_custom_call.1} parent=35 // pred_check_branch
          %368 = sbr.rel (%p366) target = $region56
        $region55: #{tpu_custom_call.1} parent=35 // pred_region
          %370 = dma.done [#allocation5], 32
        $region56: #{tpu_custom_call.1} parent=35 // pred_fallthru
          _
      $region36: #{tpu_custom_call.1} parent=5 // pred_fallthru
        _
      %p371 = scmp.le.s32.totalorder 2, %s14
      // Predicated region
      $region57: #{tpu_custom_call.1} parent=5 // pred_check
        %p372 = pneg %p371
      $region58: #{tpu_custom_call.1} parent=5 // pred_check_branch
        %374 = sbr.rel (%p372) target = $region60
      $region59: #{tpu_custom_call.1} parent=5 // pred_region
        %s375 = ssub.s32 %s14, 2
      $region60: #{tpu_custom_call.1} parent=5 // pred_fallthru
        _
    $region6: #{tpu_custom_call.1} parent=1 // loop_footer
      %s18 = sadd.s32 1, %s14
    $region7: #{tpu_custom_call.1} parent=1 // loop_footer_branch
      %13 = sbr.rel target = $region3
    $region8: #{tpu_custom_call.1} parent=1 // loop_exit
      _
    %376 = vsyncpa [#allocation4], 1
    %s377 = scalar_lea.sflag [#allocation4], 1
    %378 = vsyncpa %s377, 1
    %379 = vsyncpa [#allocation5], 1
    %s380 = scalar_lea.sflag [#allocation5], 1
    %381 = vsyncpa %s380, 1

</llo_original>
